<compile_context>
chip_gen: v5e
topology: v5e:2x2
jax: 0.10.0
libtpu: 0.0.40
codegen_flags: <defaults>
</compile_context>

<pallas_src>
import math

import jax
import jax.numpy as jnp
from jax import lax
from jax.experimental import pallas as pl
from jax.experimental.pallas import tpu as pltpu


def _round_up(x, m):
    return ((x + m - 1) // m) * m


def bow_kernel(words_ref, emb_hbm, bias_ref, out_ref, acc_ref, buf_ref, sem_ref):
    # words_ref: (S_MAX,) int32 in SMEM (scalar prefetch; sentinel-padded)
    # emb_hbm:   (nwords_p, ntags_p) f32 in HBM (memory_space=pl.ANY)
    # bias_ref:  (1, ntags_p) f32 in VMEM
    # out_ref:   (1, ntags_p) f32 in VMEM (lane-dense: ntags_p % 128 == 0)
    # acc_ref:   (1, ntags_p) f32 VMEM scratch accumulator
    # buf_ref:   (2, 1, ntags_p) f32 VMEM double buffer for gathered rows
    # sem_ref:   (2,) DMA semaphores
    S = words_ref.shape[0]

    def fetch(s, slot):
        # One embedding row HBM -> VMEM, address taken from the SMEM word id.
        pltpu.make_async_copy(
            emb_hbm.at[pl.ds(words_ref[s], 1), :],
            buf_ref.at[slot],
            sem_ref.at[slot],
        ).start()

    acc_ref[...] = jnp.zeros_like(acc_ref)
    fetch(0, 0)  # prime the double buffer

    @pl.loop(0, S)
    def _(s):
        slot = s & 1
        # Wait for this slot's row (src slice only supplies the shape).
        pltpu.make_async_copy(
            emb_hbm.at[pl.ds(0, 1), :], buf_ref.at[slot], sem_ref.at[slot]
        ).wait()

        # Prefetch the next word's row into the other slot while we accumulate.
        @pl.when(s + 1 < S)
        def _():
            fetch(s + 1, 1 - slot)

        acc_ref[...] += buf_ref[slot]

    out_ref[...] = acc_ref[...] + bias_ref[...]


def prepare_params(emb_table, bias):
    """One-time parameter transform: zero-pad to lane-friendly shapes.

    The vocab axis gets at least one extra zero row so a sentinel word id
    (== nwords) can be used for sentence padding and contributes exactly 0.
    """
    nwords, ntags = emb_table.shape
    nwords_p = _round_up(nwords + 1, 8)
    ntags_p = _round_up(ntags, 128)
    emb_p = jnp.zeros((nwords_p, ntags_p), jnp.float32)
    emb_p = emb_p.at[:nwords, :ntags].set(emb_table.astype(jnp.float32))
    bias_p = jnp.zeros((1, ntags_p), jnp.float32)
    bias_p = bias_p.at[0, :ntags].set(bias.astype(jnp.float32))
    return emb_p, bias_p


def pad_words(words, s_max, sentinel_id):
    """Pad the sentence to a fixed static length with the sentinel id."""
    words = words.astype(jnp.int32)[:s_max]
    pad = s_max - words.shape[0]
    if pad > 0:
        words = jnp.concatenate([words, jnp.full((pad,), sentinel_id, jnp.int32)])
    return words


def bow_forward(words_padded, emb_p, bias_p, ntags):
    nwords_p, ntags_p = emb_p.shape

    out_p = pl.pallas_call(
        bow_kernel,
        out_shape=jax.ShapeDtypeStruct((1, ntags_p), jnp.float32),
        grid_spec=pltpu.PrefetchScalarGridSpec(
            num_scalar_prefetch=1,   # `words` -> SMEM, passed first to the kernel
            grid=(1,),
            in_specs=[
                pl.BlockSpec(memory_space=pl.ANY),                # emb table, HBM
                pl.BlockSpec((1, ntags_p), lambda i, w: (0, 0)),  # bias, VMEM
            ],
            out_specs=pl.BlockSpec((1, ntags_p), lambda i, w: (0, 0)),
            scratch_shapes=[
                pltpu.VMEM((1, ntags_p), jnp.float32),      # accumulator
                pltpu.VMEM((2, 1, ntags_p), jnp.float32),   # row double buffer
                pltpu.SemaphoreType.DMA((2,)),
            ],
        ),
        compiler_params=pltpu.CompilerParams(
            dimension_semantics=("arbitrary",),
        ),
    )(words_padded, emb_p, bias_p)

    # Slice off the lane padding -> exact PyTorch output shape.
    return out_p[:, :ntags]


def xavier_uniform(key, shape):
    fan_in, fan_out = shape[1], shape[0]  # matches torch.nn.init.xavier_uniform_
    bound = math.sqrt(6.0 / (fan_in + fan_out))
    return jax.random.uniform(key, shape, jnp.float32, -bound, bound)


if __name__ == "__main__":
    # Small, deterministic configuration (embedding dim == ntags in BoW).
    nwords, ntags, seq_len, s_max = 100, 16, 8, 16

    key = jax.random.PRNGKey(0)
    k_e, k_b, k_words = jax.random.split(key, 3)

    # Parameters: xavier_uniform embedding (as in __init__).  self.bias is
    # zero-initialized in the module; use a non-trivial value so the bias-add
    # path is exercised (it is a free trainable parameter).
    emb_table = xavier_uniform(k_e, (nwords, ntags))            # self.emb.weight
    bias = 0.1 * jax.random.normal(k_b, (ntags,), jnp.float32)  # self.bias

    # Input: one sentence of word indices.
    words = jax.random.randint(k_words, (seq_len,), 0, nwords, dtype=jnp.int32)

    emb_p, bias_p = prepare_params(emb_table, bias)
    words_padded = pad_words(words, s_max, sentinel_id=nwords)

    out = bow_forward(words_padded, emb_p, bias_p, ntags)
    out = jax.block_until_ready(out)

    # Pure-JAX reference of the exact PyTorch arithmetic.
    emb_rows = jnp.take(emb_table, words, axis=0)              # (S, ntags)
    ref = (jnp.sum(emb_rows, axis=0) + bias).reshape(1, -1)    # (1, ntags)
    assert out.shape == (1, ntags)
    assert jnp.allclose(out, ref, atol=1e-5, rtol=1e-5)

    print("KERNEL_OK")
</pallas_src>

<mosaic_0001>
module attributes {stable_mosaic.version = 11 : i64} {
  func.func @bow_kernel(%arg0: i32, %arg1: memref<16xi32, #tpu.memory_space<smem>>, %arg2: memref<104x128xf32, #tpu.memory_space<any>>, %arg3: memref<1x128xf32, #tpu.memory_space<vmem>>, %arg4: memref<1x128xf32, #tpu.memory_space<vmem>>, %arg5: memref<1x128xf32, #tpu.memory_space<vmem>>, %arg6: memref<2x1x128xf32, #tpu.memory_space<vmem>>, %arg7: memref<2x!tpu.dma_semaphore, #tpu.memory_space<semaphore_mem>>) attributes {dimension_semantics = [#tpu.dimension_semantics<arbitrary>], iteration_bounds = array<i64: 1>, scalar_prefetch = 1 : i64, scratch_operands = 3 : i64, tpu.core_type = #tpu.core_type<tc>, window_params = [{}, {pipeline_mode = #tpu.pipeline_mode<synchronous>, transform_indices = @transform_1, window_bounds = array<i64: 1, 128>}, {pipeline_mode = #tpu.pipeline_mode<synchronous>, transform_indices = @transform_2, window_bounds = array<i64: 1, 128>}]} {
    %cst = arith.constant 0.000000e+00 : f32
    %0 = vector.broadcast %cst : f32 to vector<1x128xf32>
    %c0 = arith.constant 0 : index
    %c0_0 = arith.constant 0 : index
    %1 = vector.load %arg5[%c0, %c0_0] : memref<1x128xf32, #tpu.memory_space<vmem>>, vector<1x128xf32>
    tpu.vector_store %arg5[%c0, %c0_0], %0 {strides = array<i32>} : memref<1x128xf32, #tpu.memory_space<vmem>>, vector<1x128xf32>,
    %c0_1 = arith.constant 0 : index
    %2 = memref.load %arg1[%c0_1] : memref<16xi32, #tpu.memory_space<smem>>
    %c0_i32 = arith.constant 0 : i32
    %c0_i32_2 = arith.constant 0 : i32
    %c0_i32_3 = arith.constant 0 : i32
    %3 = tpu.memref_slice %arg2[%2, %c0_i32_3] : memref<104x128xf32, #tpu.memory_space<any>> -> memref<1x128xf32, #tpu.memory_space<any>>
    %c0_i32_4 = arith.constant 0 : i32
    %c0_i32_5 = arith.constant 0 : i32
    %4 = tpu.memref_slice %arg6[%c0_i32, %c0_i32_4, %c0_i32_5] : memref<2x1x128xf32, #tpu.memory_space<vmem>> -> memref<1x1x128xf32, #tpu.memory_space<vmem>>
    %5 = tpu.memref_squeeze %4 : memref<1x1x128xf32, #tpu.memory_space<vmem>> -> memref<1x128xf32, #tpu.memory_space<vmem>>
    %6 = tpu.memref_slice %arg7[%c0_i32_2] : memref<2x!tpu.dma_semaphore, #tpu.memory_space<semaphore_mem>> -> memref<1x!tpu.dma_semaphore, #tpu.memory_space<semaphore_mem>>
    %7 = tpu.memref_squeeze %6 : memref<1x!tpu.dma_semaphore, #tpu.memory_space<semaphore_mem>> -> memref<!tpu.dma_semaphore, #tpu.memory_space<semaphore_mem>>
    tpu.enqueue_dma source(%3 : memref<1x128xf32, #tpu.memory_space<any>>) target(%5 : memref<1x128xf32, #tpu.memory_space<vmem>>) target_semaphore(%7 : memref<!tpu.dma_semaphore, #tpu.memory_space<semaphore_mem>>)
    %c0_i32_6 = arith.constant 0 : i32
    %c16_i32 = arith.constant 16 : i32
    %8 = arith.addi %c0_i32_6, %c16_i32 : i32
    %c1_i32 = arith.constant 1 : i32
    scf.for %arg8 = %c0_i32_6 to %8 step %c1_i32  : i32 {
      %c1_i32_14 = arith.constant 1 : i32
      %13 = arith.muli %arg8, %c1_i32_14 : i32
      %c0_i32_15 = arith.constant 0 : i32
      %14 = arith.addi %c0_i32_15, %13 : i32
      %c1_i32_16 = arith.constant 1 : i32
      %15 = arith.andi %14, %c1_i32_16 : i32
      %c0_i32_17 = arith.constant 0 : i32
      %c0_i32_18 = arith.constant 0 : i32
      %16 = tpu.memref_slice %arg2[%c0_i32_17, %c0_i32_18] : memref<104x128xf32, #tpu.memory_space<any>> -> memref<1x128xf32, #tpu.memory_space<any>>
      %c0_i32_19 = arith.constant 0 : i32
      %c0_i32_20 = arith.constant 0 : i32
      %17 = tpu.memref_slice %arg6[%15, %c0_i32_19, %c0_i32_20] : memref<2x1x128xf32, #tpu.memory_space<vmem>> -> memref<1x1x128xf32, #tpu.memory_space<vmem>>
      %18 = tpu.memref_squeeze %17 : memref<1x1x128xf32, #tpu.memory_space<vmem>> -> memref<1x128xf32, #tpu.memory_space<vmem>>
      %19 = tpu.memref_slice %arg7[%15] : memref<2x!tpu.dma_semaphore, #tpu.memory_space<semaphore_mem>> -> memref<1x!tpu.dma_semaphore, #tpu.memory_space<semaphore_mem>>
      %20 = tpu.memref_squeeze %19 : memref<1x!tpu.dma_semaphore, #tpu.memory_space<semaphore_mem>> -> memref<!tpu.dma_semaphore, #tpu.memory_space<semaphore_mem>>
      tpu.wait_dma2 semaphore(%20 : memref<!tpu.dma_semaphore, #tpu.memory_space<semaphore_mem>>) src(%16 : memref<1x128xf32, #tpu.memory_space<any>>) dst(%18 : memref<1x128xf32, #tpu.memory_space<vmem>>)
      %c1_i32_21 = arith.constant 1 : i32
      %21 = arith.addi %14, %c1_i32_21 : i32
      %c16_i32_22 = arith.constant 16 : i32
      %22 = arith.cmpi slt, %21, %c16_i32_22 : i32
      %23 = arith.extui %22 : i1 to i32
      %c0_i32_23 = arith.constant 0 : i32
      %24 = arith.cmpi ne, %23, %c0_i32_23 : i32
      scf.if %24 {
        %c1_i32_30 = arith.constant 1 : i32
        %31 = arith.addi %14, %c1_i32_30 : i32
        %c1_i32_31 = arith.constant 1 : i32
        %32 = arith.subi %c1_i32_31, %15 : i32
        %33 = arith.index_cast %31 : i32 to index
        %34 = memref.load %arg1[%33] : memref<16xi32, #tpu.memory_space<smem>>
        %c0_i32_32 = arith.constant 0 : i32
        %35 = tpu.memref_slice %arg2[%34, %c0_i32_32] : memref<104x128xf32, #tpu.memory_space<any>> -> memref<1x128xf32, #tpu.memory_space<any>>
        %c0_i32_33 = arith.constant 0 : i32
        %c0_i32_34 = arith.constant 0 : i32
        %36 = tpu.memref_slice %arg6[%32, %c0_i32_33, %c0_i32_34] : memref<2x1x128xf32, #tpu.memory_space<vmem>> -> memref<1x1x128xf32, #tpu.memory_space<vmem>>
        %37 = tpu.memref_squeeze %36 : memref<1x1x128xf32, #tpu.memory_space<vmem>> -> memref<1x128xf32, #tpu.memory_space<vmem>>
        %38 = tpu.memref_slice %arg7[%32] : memref<2x!tpu.dma_semaphore, #tpu.memory_space<semaphore_mem>> -> memref<1x!tpu.dma_semaphore, #tpu.memory_space<semaphore_mem>>
        %39 = tpu.memref_squeeze %38 : memref<1x!tpu.dma_semaphore, #tpu.memory_space<semaphore_mem>> -> memref<!tpu.dma_semaphore, #tpu.memory_space<semaphore_mem>>
        tpu.enqueue_dma source(%35 : memref<1x128xf32, #tpu.memory_space<any>>) target(%37 : memref<1x128xf32, #tpu.memory_space<vmem>>) target_semaphore(%39 : memref<!tpu.dma_semaphore, #tpu.memory_space<semaphore_mem>>)
      } else {
      }
      %c0_24 = arith.constant 0 : index
      %c0_25 = arith.constant 0 : index
      %25 = vector.load %arg5[%c0_24, %c0_25] : memref<1x128xf32, #tpu.memory_space<vmem>>, vector<1x128xf32>
      %26 = arith.index_cast %15 : i32 to index
      %c0_26 = arith.constant 0 : index
      %c0_27 = arith.constant 0 : index
      %27 = vector.load %arg6[%26, %c0_26, %c0_27] : memref<2x1x128xf32, #tpu.memory_space<vmem>>, vector<1x1x128xf32>
      %28 = vector.shape_cast %27 : vector<1x1x128xf32> to vector<1x128xf32>
      %29 = arith.addf %25, %28 : vector<1x128xf32>
      %c0_28 = arith.constant 0 : index
      %c0_29 = arith.constant 0 : index
      %30 = vector.load %arg5[%c0_28, %c0_29] : memref<1x128xf32, #tpu.memory_space<vmem>>, vector<1x128xf32>
      tpu.vector_store %arg5[%c0_28, %c0_29], %29 {strides = array<i32>} : memref<1x128xf32, #tpu.memory_space<vmem>>, vector<1x128xf32>,
    }
    %c16_i32_7 = arith.constant 16 : i32
    %c0_8 = arith.constant 0 : index
    %c0_9 = arith.constant 0 : index
    %9 = vector.load %arg5[%c0_8, %c0_9] : memref<1x128xf32, #tpu.memory_space<vmem>>, vector<1x128xf32>
    %c0_10 = arith.constant 0 : index
    %c0_11 = arith.constant 0 : index
    %10 = vector.load %arg3[%c0_10, %c0_11] : memref<1x128xf32, #tpu.memory_space<vmem>>, vector<1x128xf32>
    %11 = arith.addf %9, %10 : vector<1x128xf32>
    %c0_12 = arith.constant 0 : index
    %c0_13 = arith.constant 0 : index
    %12 = vector.load %arg4[%c0_12, %c0_13] : memref<1x128xf32, #tpu.memory_space<vmem>>, vector<1x128xf32>
    tpu.vector_store %arg4[%c0_12, %c0_13], %11 {strides = array<i32>} : memref<1x128xf32, #tpu.memory_space<vmem>>, vector<1x128xf32>,
    return
  }
  func.func @transform_1(%arg0: i32, %arg1: memref<16xi32, #tpu.memory_space<smem>>) -> (i32, i32) {
    %c0_i32 = arith.constant 0 : i32
    %c0_i32_0 = arith.constant 0 : i32
    %c0_i32_1 = arith.constant 0 : i32
    return %c0_i32, %c0_i32_0 : i32, i32
  }
  func.func @transform_2(%arg0: i32, %arg1: memref<16xi32, #tpu.memory_space<smem>>) -> (i32, i32) {
    %c0_i32 = arith.constant 0 : i32
    %c0_i32_0 = arith.constant 0 : i32
    %c0_i32_1 = arith.constant 0 : i32
    return %c0_i32, %c0_i32_0 : i32, i32
  }
}

</mosaic_0001>

<llo_original>
// kernel: tpu_custom_call.1
$region0: #{tpu_custom_call.1}
  #allocation0 [shape = 'u32[]', space=smem, size = 0x4, offset = 0x4, fixed_abs, tag = 'smem constant byte address 0x4 - core index']
  #allocation1 [shape = 'u32[72,128]{1,0:T(1,128)}', space=vmem, size = 0x9000, scoped, tag = 'internal scratch']
  #allocation2 [shape = 'f32[1,128]{1,0:T(1,128)}', space=vmem, size = 0x200, scoped, tag = 'scratch operand']
  #allocation3 [shape = 'f32[2,1,128]{2,1,0:T(1,128)}', space=vmem, size = 0x400, scoped, tag = 'scratch operand']
  #allocation4 [shape = 's32[2]{0}', space=sflag, size = 0x8, scoped, tag = 'scratch operand']
  #allocation5 [shape = 's32[1]{0}', space=sflag, size = 0x4, scoped, tag = 'scoped memory for tpu_custom_call.1']
  #allocation6 [shape = 'u8[512]{0}', space=smem, size = 0x200, scoped, tag = 'prefetched SMEM operand 0']
  #allocation9 [shape = 's32[]', space=sflag, size = 0x4, offset = 0, fixed_abs, tag = 'sflag constant byte address 0x0 - dummy sync flag']
  #allocation10 [shape = 's32[]', space=sflag, size = 0x4, offset = 0, fixed_abs, tag = 'sflag constant byte address 0x0 - dummy sync flag']
  #allocation11 [shape = 'u32[]', space=smem, size = 0x4, offset = 0x44, fixed_abs, tag = 'smem constant byte address 0x44 - assertion arg 0']
  #allocation12 [shape = 'u32[]', space=smem, size = 0x4, offset = 0x48, fixed_abs, tag = 'smem constant byte address 0x48 - assertion arg 1']
  #allocation13 [shape = 's32[]', space=sflag, size = 0x4, offset = 0, fixed_abs, tag = 'sflag constant byte address 0x0 - dummy sync flag']
  #allocation14 [shape = 's32[]', space=sflag, size = 0x4, offset = 0, fixed_abs, tag = 'sflag constant byte address 0x0 - dummy sync flag']
  %s0 = inlined_call_operand.hbm [shape: s32[16], index: 0, kind: input, shape index: {}]
  %s1 = inlined_call_operand.hbm [shape: f32[104,128], index: 1, kind: input, shape index: {}]
  %s2 = inlined_call_operand.vmem [shape: f32[1,128], index: 2, kind: input, shape index: {}]
  %s3 = inlined_call_operand.hbm [shape: f32[1,128], index: 3, kind: output, shape index: {}]
  %s4 = sld [smem:[#allocation0]]
  $region33: #{tpu_custom_call.1} parent=0
    _
  %s6 = ssub.s32 1, %s4
  %s7 = scalar_select 0, %s6, %s4
  %s9 = sshll.u32 %s0, 4
  %s10 = int_to_ptr.hbm [resolvable:$true] %s9
  %12 = dma.hbm_to_smem %s10, 16, [#allocation6], [#allocation5]
  %14 = dma.done [#allocation5], 16
  %15 = sfence
  $region1: #{tpu_custom_call.1} parent=0
    #allocation7 [shape = 'u8[512]{0}', space=vmem, size = 0x400, scoped, tag = 'output window, operand 0, single buffered']
    #allocation8 [shape = 's32[1]{0}', space=sflag, size = 0x4, scoped, tag = 'scoped memory for tpu_custom_call.1']
    %16 = vsyncpa [#allocation8], 0
    // Predicated region
    $region2: #{tpu_custom_call.1} parent=1 // pred_check
      _
    $region3: #{tpu_custom_call.1} parent=1 // pred_check_branch
      %18 = sbr.rel (0) target = $region5
    $region4: #{tpu_custom_call.1} parent=1 // pred_region
      _
    $region5: #{tpu_custom_call.1} parent=1 // pred_fallthru
      _
    %19 = vst [vmem:[#allocation2] sm:$0x1] 0.0
    %s20 = sld [smem:[#allocation6]]
    %s21 = scalar_lea.hbm %s1, %s20
    // Predicated region
    $region6: #{tpu_custom_call.1} parent=1 // pred_check
      _
    $region7: #{tpu_custom_call.1} parent=1 // pred_check_branch
      %23 = sbr.rel target = $region9
    $region8: #{tpu_custom_call.1} parent=1 // pred_region
      %24 = sst [smem:[#allocation11]] [#allocation10]
      %25 = sst [smem:[#allocation12]] [#allocation9]
    $region9: #{tpu_custom_call.1} parent=1 // pred_fallthru
      _
    %27 = shalt.err (0)
    %s29 = sshll.u32 %s21, 4
    %s30 = int_to_ptr.hbm [resolvable:$true] %s29
    %s31 = sshll.u32 [#allocation3], 4
    %s32 = int_to_ptr.vmem [resolvable:$true] %s31
    %34 = dma.hbm_to_vmem [thread:$0]  %s30, 16, %s32, [#allocation4]
    loop: start=0, step=1, limit=16
    $region10: #{tpu_custom_call.1} parent=1 // loop_pre_header
      _
    $region11: #{tpu_custom_call.1} parent=1 // loop_header
      %s36 = sphi 0, %s40
      %p37 = scmp.ge.s32.totalorder %s36, 16
    $region12: #{tpu_custom_call.1} parent=1 // loop_header_branch
      %39 = sbr.rel (%p37) target = $region16
    $region13: #{tpu_custom_call.1} parent=1 // loop_body
      %s41 = sand.u32 %s36, 1
      %s42 = scalar_lea.vmem [#allocation3], %s41
      %s43 = scalar_lea.sflag [#allocation4], %s41
      %s44 = smul.u32 1, 1
      %s45 = sshll.u32 %s44, 4
      %46 = dma.done %s43, %s45
      %s47 = sadd.s32 %s36, 1
      %p48 = scmp.lt.s32.totalorder %s47, 16
      // Predicated region
      $region17: #{tpu_custom_call.1} parent=13 // pred_check
        %p49 = pneg %p48
      $region18: #{tpu_custom_call.1} parent=13 // pred_check_branch
        %51 = sbr.rel (%p49) target = $region20
      $region19: #{tpu_custom_call.1} parent=13 // pred_region
        %s52 = ssub.s32 1, %s41
        %s53 = sld [smem:[#allocation6 + %s47]]
        %s54 = scalar_lea.hbm %s1, %s53
        %s55 = scalar_lea.vmem [#allocation3], %s52
        %s56 = scalar_lea.sflag [#allocation4], %s52
        // Predicated region
        $region21: #{tpu_custom_call.1} parent=19 // pred_check
          _
        $region22: #{tpu_custom_call.1} parent=19 // pred_check_branch
          %58 = sbr.rel target = $region24
        $region23: #{tpu_custom_call.1} parent=19 // pred_region
          %59 = sst [smem:[#allocation11]] [#allocation14]
          %60 = sst [smem:[#allocation12]] [#allocation13]
        $region24: #{tpu_custom_call.1} parent=19 // pred_fallthru
          _
        %62 = shalt.err (0)
        %s64 = sshll.u32 %s54, 4
        %s65 = int_to_ptr.hbm [resolvable:$true] %s64
        %s66 = sshll.u32 %s55, 4
        %s67 = int_to_ptr.vmem [resolvable:$true] %s66
        %69 = dma.hbm_to_vmem [thread:$0]  %s65, 16, %s67, %s56
      $region20: #{tpu_custom_call.1} parent=13 // pred_fallthru
        _
      %v70 = vld [vmem:[#allocation2] sm:$0x1]
      %v71 = vld [vmem:[%s42] sm:$0x1]
      %v72 = vadd.f32 %v70, %v71
      %73 = vst [vmem:[#allocation2] sm:$0x1] %v72
    $region14: #{tpu_custom_call.1} parent=1 // loop_footer
      %s40 = sadd.s32 1, %s36
    $region15: #{tpu_custom_call.1} parent=1 // loop_footer_branch
      %35 = sbr.rel target = $region11
    $region16: #{tpu_custom_call.1} parent=1 // loop_exit
      _
    %v74 = vld [vmem:[#allocation2] sm:$0x1]
    %v75 = vld [vmem:[%s2] sm:$0x1]
    %v76 = vadd.f32 %v74, %v75
    %77 = vst [vmem:[#allocation7] sm:$0x1] %v76
    // Predicated region
    $region25: #{tpu_custom_call.1} parent=1 // pred_check
      _
    $region26: #{tpu_custom_call.1} parent=1 // pred_check_branch
      %79 = sbr.rel (0) target = $region28
    $region27: #{tpu_custom_call.1} parent=1 // pred_region
      %81 = vsyncadd [#allocation8], 0
      %s83 = sshll.u32 [#allocation7], 4
      %s84 = int_to_ptr.vmem [resolvable:$true] %s83
      %s85 = sshll.u32 %s3, 4
      %s86 = int_to_ptr.hbm [resolvable:$true] %s85
      %88 = dma.vmem_to_hbm [thread:$0]  %s84, 16, %s86, [#allocation8]
    $region28: #{tpu_custom_call.1} parent=1 // pred_fallthru
      _
    // Predicated region
    $region29: #{tpu_custom_call.1} parent=1 // pred_check
      _
    $region30: #{tpu_custom_call.1} parent=1 // pred_check_branch
      %90 = sbr.rel (0) target = $region32
    $region31: #{tpu_custom_call.1} parent=1 // pred_region
      %92 = dma.done [#allocation8], 16
    $region32: #{tpu_custom_call.1} parent=1 // pred_fallthru
      _
    %93 = vsyncpa [#allocation8], 1
  %94 = vsyncmov [#allocation4]
  %s95 = vpop.sfrf %94
  %p96 = scmp.eq.s32.totalorder %s95, 0
  %p97 = pneg %p96
  %99 = shalt.err (%p97)
  %s100 = scalar_lea.sflag [#allocation4], 1
  %101 = vsyncmov %s100
  %s102 = vpop.sfrf %101
  %p103 = scmp.eq.s32.totalorder %s102, 0
  %p104 = pneg %p103
  %106 = shalt.err (%p104)

</llo_original>
